<compile_context>
chip_gen: v7x
topology: tpu7x:2x2x1
jax: 0.10.0
libtpu: 0.0.40
codegen_flags: <defaults>
</compile_context>

<pallas_src>
import jax
import jax.numpy as jnp
from jax.experimental import pallas as pl
from jax.experimental.pallas import tpu as pltpu

_EPS = float(jnp.finfo(jnp.float32).eps)  # nn.RMSNorm(eps=None) for float32


def _round_up(x, m):
    return ((x + m - 1) // m) * m


def _patch_embed_kernel(p_ref, w_ref, b_ref, g_ref, o_ref):
    # p_ref: (TM, K)  im2col patch rows for this tile
    # w_ref: (K, E)   conv weight, (kh, kw, Cin, E) flattened
    # b_ref: (1, E)   conv bias
    # g_ref: (1, E)   RMSNorm weight
    # o_ref: (TM, E)  output token rows
    acc = jnp.dot(p_ref[...], w_ref[...], preferred_element_type=jnp.float32)
    acc = acc + b_ref[...].astype(jnp.float32)                  # conv bias
    # RMSNorm over the embedding axis (kept whole in this block).
    ms = jnp.mean(acc * acc, axis=-1, keepdims=True)
    inv = jax.lax.rsqrt(ms + _EPS)                              # EUP rsqrt
    o_ref[...] = (acc * inv * g_ref[...].astype(jnp.float32)).astype(o_ref.dtype)


def _pick_row_tile(M, K, E):
    """Row-tile size: as large as comfortably fits VMEM, >=2 grid steps."""
    if M <= 8:
        return _round_up(max(M, 1), 8)
    # double-buffered patch tile + output tile, f32-ish bound
    per_row_bytes = 2 * (K + E) * 4
    budget = 24 << 20  # leave headroom for the resident weight + scratch
    tm_cap = max(8, (budget // per_row_bytes) // 8 * 8)
    tm = min(512, tm_cap, _round_up(pl.cdiv(M, 2), 8))
    return max(8, tm)


def overlap_patch_embed(x, weight, bias, gamma, *, patch_size=7, stride=4):
    """Pallas equivalent of OverlapPatchEmbed.forward(x).

    x:      (B, Cin, H, W)     NCHW, like PyTorch
    weight: (kh, kw, Cin, E)   == torch conv weight (E,Cin,kh,kw).permute(2,3,1,0)
    bias:   (E,)               conv bias
    gamma:  (E,)               RMSNorm weight
    returns (tokens (B, Ho*Wo, E), Ho, Wo)
    """
    B, Cin, H, W = x.shape
    kh = kw = patch_size
    sh = sw = stride
    ph = pw = patch_size // 2
    Ho = (H + 2 * ph - kh) // sh + 1
    Wo = (W + 2 * pw - kw) // sw + 1
    E = weight.shape[-1]
    K = kh * kw * Cin

    # ---- im2col (layout glue in plain JAX) --------------------------------
    x_nhwc = jnp.transpose(x, (0, 2, 3, 1))
    x_pad = jnp.pad(x_nhwc, ((0, 0), (ph, ph), (pw, pw), (0, 0)))
    cols = []
    for ky in range(kh):
        for kx in range(kw):
            cols.append(
                jax.lax.slice(
                    x_pad,
                    (0, ky, kx, 0),
                    (B, ky + (Ho - 1) * sh + 1, kx + (Wo - 1) * sw + 1, Cin),
                    (1, sh, sw, 1),
                )
            )
    # (B, Ho, Wo, kh*kw, Cin) -> (M, K) with K ordered (ky, kx, cin)
    patches = jnp.stack(cols, axis=3).reshape(B * Ho * Wo, K)
    w2d = weight.reshape(K, E)
    bias2 = bias.reshape(1, E)
    gamma2 = gamma.reshape(1, E)

    # ---- row tiling --------------------------------------------------------
    M = B * Ho * Wo
    TM = _pick_row_tile(M, K, E)
    Mp = _round_up(M, TM)
    if Mp != M:
        patches = jnp.pad(patches, ((0, Mp - M), (0, 0)))

    grid_spec = pl.GridSpec(
        grid=(Mp // TM,),
        in_specs=[
            pl.BlockSpec((TM, K), lambda i: (i, 0)),   # streamed patch rows
            pl.BlockSpec((K, E), lambda i: (0, 0)),    # grid-invariant weight
            pl.BlockSpec((1, E), lambda i: (0, 0)),    # conv bias
            pl.BlockSpec((1, E), lambda i: (0, 0)),    # RMSNorm weight
        ],
        out_specs=pl.BlockSpec((TM, E), lambda i: (i, 0)),
    )

    out = pl.pallas_call(
        _patch_embed_kernel,
        out_shape=jax.ShapeDtypeStruct((Mp, E), x.dtype),
        grid_spec=grid_spec,
        compiler_params=pltpu.CompilerParams(
            dimension_semantics=("parallel",),
            vmem_limit_bytes=64 << 20,
        ),
    )(patches, w2d, bias2, gamma2)

    tokens = out[:M].reshape(B, Ho * Wo, E)
    return tokens, Ho, Wo


def _reference(x, weight, bias, gamma, *, patch_size=7, stride=4):
    """Independent plain-JAX reference (conv + bias + RMSNorm)."""
    ph = pw = patch_size // 2
    x_nhwc = jnp.transpose(x, (0, 2, 3, 1)).astype(jnp.float32)
    y = jax.lax.conv_general_dilated(
        x_nhwc, weight.astype(jnp.float32),
        window_strides=(stride, stride),
        padding=((ph, ph), (pw, pw)),
        dimension_numbers=("NHWC", "HWIO", "NHWC"),
    )
    y = y + bias.astype(jnp.float32)
    B, Ho, Wo, E = y.shape
    y = y.reshape(B, Ho * Wo, E)
    ms = jnp.mean(y * y, axis=-1, keepdims=True)
    y = y * jax.lax.rsqrt(ms + _EPS) * gamma.astype(jnp.float32)
    return y.astype(x.dtype), Ho, Wo


if __name__ == "__main__":
    # Small shapes consistent with the module: 7x7 conv, stride 4, pad 3.
    B, Cin, H, W = 2, 3, 16, 16
    E = 64
    patch_size, stride = 7, 4

    key = jax.random.PRNGKey(0)
    kx, kw_, kb, kg = jax.random.split(key, 4)

    x = jax.random.normal(kx, (B, Cin, H, W), dtype=jnp.float32)
    # Conv2d init: normal(0, sqrt(2 / fan_out)), fan_out = kh*kw*E.
    std = (2.0 / (patch_size * patch_size * E)) ** 0.5
    weight = std * jax.random.normal(kw_, (patch_size, patch_size, Cin, E),
                                     dtype=jnp.float32)
    bias = 0.1 * jax.random.normal(kb, (E,), dtype=jnp.float32)
    gamma = 1.0 + 0.1 * jax.random.normal(kg, (E,), dtype=jnp.float32)

    y, Ho, Wo = overlap_patch_embed(x, weight, bias, gamma,
                                    patch_size=patch_size, stride=stride)
    y = jax.block_until_ready(y)

    y_ref, Ho_ref, Wo_ref = _reference(x, weight, bias, gamma,
                                       patch_size=patch_size, stride=stride)
    assert (Ho, Wo) == (Ho_ref, Wo_ref)
    assert y.shape == (B, Ho * Wo, E)
    assert jnp.allclose(y, y_ref, atol=1e-4, rtol=1e-4)

    print("KERNEL_OK")
</pallas_src>

<mosaic_0001>
module attributes {stable_mosaic.version = 11 : i64} {
  func.func @_patch_embed_kernel(%arg0: i32, %arg1: memref<16x147xf32, #tpu.memory_space<vmem>>, %arg2: memref<147x64xf32, #tpu.memory_space<vmem>>, %arg3: memref<1x64xf32, #tpu.memory_space<vmem>>, %arg4: memref<1x64xf32, #tpu.memory_space<vmem>>, %arg5: memref<16x64xf32, #tpu.memory_space<vmem>>) attributes {dimension_semantics = [#tpu.dimension_semantics<parallel>], iteration_bounds = array<i64: 2>, scalar_prefetch = 0 : i64, scratch_operands = 0 : i64, tpu.core_type = #tpu.core_type<tc>, window_params = [{transform_indices = @transform_0, window_bounds = array<i64: 16, 147>}, {pipeline_mode = #tpu.pipeline_mode<synchronous>, transform_indices = @transform_1, window_bounds = array<i64: 147, 64>}, {pipeline_mode = #tpu.pipeline_mode<synchronous>, transform_indices = @transform_2, window_bounds = array<i64: 1, 64>}, {pipeline_mode = #tpu.pipeline_mode<synchronous>, transform_indices = @transform_3, window_bounds = array<i64: 1, 64>}, {transform_indices = @transform_4, window_bounds = array<i64: 16, 64>}]} {
    %c0 = arith.constant 0 : index
    %c0_0 = arith.constant 0 : index
    %0 = vector.load %arg1[%c0, %c0_0] : memref<16x147xf32, #tpu.memory_space<vmem>>, vector<16x147xf32>
    %c0_1 = arith.constant 0 : index
    %c0_2 = arith.constant 0 : index
    %1 = vector.load %arg2[%c0_1, %c0_2] : memref<147x64xf32, #tpu.memory_space<vmem>>, vector<147x64xf32>
    %cst = arith.constant dense<0.000000e+00> : vector<16x64xf32>
    %2 = tpu.matmul %0, %1, %cst {dimension_numbers = #tpu.dot_dimension_numbers<[1], [0], [0], [1], [0, 0, 1, 1], [], []>} : vector<16x147xf32>, vector<147x64xf32>, vector<16x64xf32> -> vector<16x64xf32>
    %c0_3 = arith.constant 0 : index
    %c0_4 = arith.constant 0 : index
    %3 = vector.load %arg3[%c0_3, %c0_4] : memref<1x64xf32, #tpu.memory_space<vmem>>, vector<1x64xf32>
    %4 = vector.broadcast %3 : vector<1x64xf32> to vector<16x64xf32>
    %5 = arith.addf %2, %4 : vector<16x64xf32>
    %6 = arith.mulf %5, %5 : vector<16x64xf32>
    %cst_5 = arith.constant dense<0.000000e+00> : vector<16xf32>
    %7 = vector.multi_reduction <add>, %6, %cst_5 [1] : vector<16x64xf32> to vector<16xf32>
    %8 = vector.shape_cast %7 : vector<16xf32> to vector<16x1xf32>
    %cst_6 = arith.constant 6.400000e+01 : f32
    %9 = vector.broadcast %cst_6 : f32 to vector<16x1xf32>
    %10 = arith.divf %8, %9 : vector<16x1xf32>
    %cst_7 = arith.constant 1.1920929E-7 : f32
    %11 = vector.broadcast %cst_7 : f32 to vector<16x1xf32>
    %12 = arith.addf %10, %11 : vector<16x1xf32>
    %13 = math.rsqrt %12 : vector<16x1xf32>
    %14 = vector.broadcast %13 : vector<16x1xf32> to vector<16x64xf32>
    %15 = arith.mulf %5, %14 : vector<16x64xf32>
    %c0_8 = arith.constant 0 : index
    %c0_9 = arith.constant 0 : index
    %16 = vector.load %arg4[%c0_8, %c0_9] : memref<1x64xf32, #tpu.memory_space<vmem>>, vector<1x64xf32>
    %17 = vector.broadcast %16 : vector<1x64xf32> to vector<16x64xf32>
    %18 = arith.mulf %15, %17 : vector<16x64xf32>
    %c0_10 = arith.constant 0 : index
    %c0_11 = arith.constant 0 : index
    %19 = vector.load %arg5[%c0_10, %c0_11] : memref<16x64xf32, #tpu.memory_space<vmem>>, vector<16x64xf32>
    tpu.vector_store %arg5[%c0_10, %c0_11], %18 {strides = array<i32>} : memref<16x64xf32, #tpu.memory_space<vmem>>, vector<16x64xf32>,
    return
  }
  func.func @transform_0(%arg0: i32) -> (i32, i32) {
    %c0_i32 = arith.constant 0 : i32
    %c0_i32_0 = arith.constant 0 : i32
    return %arg0, %c0_i32 : i32, i32
  }
  func.func @transform_1(%arg0: i32) -> (i32, i32) {
    %c0_i32 = arith.constant 0 : i32
    %c0_i32_0 = arith.constant 0 : i32
    %c0_i32_1 = arith.constant 0 : i32
    return %c0_i32, %c0_i32_0 : i32, i32
  }
  func.func @transform_2(%arg0: i32) -> (i32, i32) {
    %c0_i32 = arith.constant 0 : i32
    %c0_i32_0 = arith.constant 0 : i32
    %c0_i32_1 = arith.constant 0 : i32
    return %c0_i32, %c0_i32_0 : i32, i32
  }
  func.func @transform_3(%arg0: i32) -> (i32, i32) {
    %c0_i32 = arith.constant 0 : i32
    %c0_i32_0 = arith.constant 0 : i32
    %c0_i32_1 = arith.constant 0 : i32
    return %c0_i32, %c0_i32_0 : i32, i32
  }
  func.func @transform_4(%arg0: i32) -> (i32, i32) {
    %c0_i32 = arith.constant 0 : i32
    %c0_i32_0 = arith.constant 0 : i32
    return %arg0, %c0_i32 : i32, i32
  }
}

</mosaic_0001>

<llo_original>
// kernel: tpu_custom_call.1
$region0: #{tpu_custom_call.1}
  #allocation0 [shape = 'u32[]', space=smem, size = 0x4, offset = 0x4, fixed_abs, tag = 'smem constant byte address 0x4 - core index']
  #allocation1 [shape = 'u32[144,128]{1,0:T(1,128)}', space=vmem, size = 0x12000, scoped, tag = 'internal scratch']
  %s0 = inlined_call_operand.hbm [shape: f32[32,147], index: 0, kind: input, shape index: {}]
  %s1 = inlined_call_operand.hbm [shape: f32[147,64], index: 1, kind: input, shape index: {}]
  %s2 = inlined_call_operand.hbm [shape: f32[1,64], index: 2, kind: input, shape index: {}]
  %s3 = inlined_call_operand.hbm [shape: f32[1,64], index: 3, kind: input, shape index: {}]
  %s4 = inlined_call_operand.hbm [shape: f32[32,64], index: 4, kind: output, shape index: {}]
  %s5 = sld [smem:[#allocation0]]
  $region65: #{tpu_custom_call.1} parent=0
    _
  %s7 = ssub.s32 1, %s5
  %s8 = scalar_select 0, %s7, %s5
  $region1: #{tpu_custom_call.1} parent=0
    #allocation2 [shape = 'u8[32768]{0}', space=vmem, size = 0x8000, scoped, tag = 'input window, operand 0']
    #allocation3 [shape = 's32[2]{0}', space=sflag, size = 0x8, scoped, tag = 'scoped memory for tpu_custom_call.1']
    #allocation4 [shape = 's32[2]{0}', space=sflag, size = 0x8, scoped, tag = 'scoped memory for tpu_custom_call.1']
    #allocation5 [shape = 'u8[77824]{0}', space=vmem, size = 0x13000, scoped, tag = 'input window, operand 1, single buffered']
    #allocation6 [shape = 's32[1]{0}', space=sflag, size = 0x4, scoped, tag = 'scoped memory for tpu_custom_call.1']
    #allocation7 [shape = 'u8[512]{0}', space=vmem, size = 0x400, scoped, tag = 'input window, operand 2, single buffered']
    #allocation8 [shape = 'u8[512]{0}', space=vmem, size = 0x400, scoped, tag = 'input window, operand 3, single buffered']
    #allocation9 [shape = 's32[1]{0}', space=sflag, size = 0x4, scoped, tag = 'scoped memory for tpu_custom_call.1']
    #allocation10 [shape = 'u8[16384]{0}', space=vmem, size = 0x4000, scoped, tag = 'output window, operand 0']
    %9 = vsyncpa [#allocation3], 0
    %s10 = scalar_lea.sflag [#allocation3], 1
    %11 = vsyncpa %s10, 0
    %12 = vsyncpa [#allocation6], 0
    %13 = vsyncpa [#allocation9], 0
    %14 = vsyncpa [#allocation4], 0
    %s15 = scalar_lea.sflag [#allocation4], 1
    %16 = vsyncpa %s15, 0
    loop: start=0, step=1, limit=4
    $region2: #{tpu_custom_call.1} parent=1 // loop_pre_header
      _
    $region3: #{tpu_custom_call.1} parent=1 // loop_header
      %s18 = sphi 0, %s22
      %p19 = scmp.ge.s32.totalorder %s18, 4
      %s28 = sphi 0, %s30
      %s31 = sphi 0, %s28
      %s32 = sphi 0, %s31
      %s48 = sphi 0, %s32
      %s52 = sphi 0, %s52
      %s54 = sphi 0, %s52
      %s55 = sphi 0, %s54
      %s69 = sphi 0, %s55
      %s73 = sphi 0, %s73
      %s75 = sphi 0, %s73
      %s76 = sphi 0, %s75
      %s90 = sphi 0, %s76
      %s94 = sphi 0, %s94
      %s96 = sphi 0, %s94
      %s97 = sphi 0, %s96
      %s111 = sphi 0, %s97
      %s117 = sphi 0, %s119
      %s120 = sphi 0, %s117
      %s121 = sphi 0, %s120
      %s137 = sphi 0, %s121
    $region4: #{tpu_custom_call.1} parent=1 // loop_header_branch
      %21 = sbr.rel (%p19) target = $region8
    $region5: #{tpu_custom_call.1} parent=1 // loop_body
      %s23 = ssub.s32 %s18, 1
      %s24 = ssub.s32 %s18, 2
      %s25 = sadd.s32 %s18, 1
      %s26 = ssub.s32 %s18, %s25
      %p27 = scmp.eq.s32.totalorder %s26, 0
      %s29 = sadd.s32 %s28, 1
      %s30 = scalar_select %p27, %s28, %s29
      %p33 = pneg %p27
      %p34 = scmp.eq.s32.totalorder %s18, 1
      %p35 = por %p33, %p34
      %p36 = scmp.ne.s32.totalorder %s28, %s31
      %p37 = scmp.eq.s32.totalorder %s18, 0
      %p38 = por %p36, %p37
      %p39 = scmp.ne.s32.totalorder %s28, %s31
      %p40 = scmp.eq.s32.totalorder %s23, 1
      %p41 = por %p39, %p40
      %p42 = scmp.ne.s32.totalorder %s31, %s32
      %p43 = scmp.eq.s32.totalorder %s23, 0
      %p44 = por %p42, %p43
      %p45 = scmp.ne.s32.totalorder %s31, %s32
      %p46 = scmp.eq.s32.totalorder %s24, 1
      %p47 = por %p45, %p46
      %p49 = scmp.ne.s32.totalorder %s32, %s48
      %p50 = scmp.eq.s32.totalorder %s24, 0
      %p51 = por %p49, %p50
      %s53 = sadd.s32 %s52, 1
      %p56 = scmp.eq.s32.totalorder %s18, 1
      %p57 = scmp.ne.s32.totalorder %s52, %s54
      %p58 = scmp.eq.s32.totalorder %s18, 0
      %p59 = por %p57, %p58
      %p60 = scmp.ne.s32.totalorder %s52, %s54
      %p61 = scmp.eq.s32.totalorder %s23, 1
      %p62 = por %p60, %p61
      %p63 = scmp.ne.s32.totalorder %s54, %s55
      %p64 = scmp.eq.s32.totalorder %s23, 0
      %p65 = por %p63, %p64
      %p66 = scmp.ne.s32.totalorder %s54, %s55
      %p67 = scmp.eq.s32.totalorder %s24, 1
      %p68 = por %p66, %p67
      %p70 = scmp.ne.s32.totalorder %s55, %s69
      %p71 = scmp.eq.s32.totalorder %s24, 0
      %p72 = por %p70, %p71
      %s74 = sadd.s32 %s73, 1
      %p77 = scmp.eq.s32.totalorder %s18, 1
      %p78 = scmp.ne.s32.totalorder %s73, %s75
      %p79 = scmp.eq.s32.totalorder %s18, 0
      %p80 = por %p78, %p79
      %p81 = scmp.ne.s32.totalorder %s73, %s75
      %p82 = scmp.eq.s32.totalorder %s23, 1
      %p83 = por %p81, %p82
      %p84 = scmp.ne.s32.totalorder %s75, %s76
      %p85 = scmp.eq.s32.totalorder %s23, 0
      %p86 = por %p84, %p85
      %p87 = scmp.ne.s32.totalorder %s75, %s76
      %p88 = scmp.eq.s32.totalorder %s24, 1
      %p89 = por %p87, %p88
      %p91 = scmp.ne.s32.totalorder %s76, %s90
      %p92 = scmp.eq.s32.totalorder %s24, 0
      %p93 = por %p91, %p92
      %s95 = sadd.s32 %s94, 1
      %p98 = scmp.eq.s32.totalorder %s18, 1
      %p99 = scmp.ne.s32.totalorder %s94, %s96
      %p100 = scmp.eq.s32.totalorder %s18, 0
      %p101 = por %p99, %p100
      %p102 = scmp.ne.s32.totalorder %s94, %s96
      %p103 = scmp.eq.s32.totalorder %s23, 1
      %p104 = por %p102, %p103
      %p105 = scmp.ne.s32.totalorder %s96, %s97
      %p106 = scmp.eq.s32.totalorder %s23, 0
      %p107 = por %p105, %p106
      %p108 = scmp.ne.s32.totalorder %s96, %s97
      %p109 = scmp.eq.s32.totalorder %s24, 1
      %p110 = por %p108, %p109
      %p112 = scmp.ne.s32.totalorder %s97, %s111
      %p113 = scmp.eq.s32.totalorder %s24, 0
      %p114 = por %p112, %p113
      %s115 = ssub.s32 %s18, %s25
      %p116 = scmp.eq.s32.totalorder %s115, 0
      %s118 = sadd.s32 %s117, 1
      %s119 = scalar_select %p116, %s117, %s118
      %p122 = pneg %p116
      %p123 = scmp.eq.s32.totalorder %s18, 1
      %p124 = por %p122, %p123
      %p125 = scmp.ne.s32.totalorder %s117, %s120
      %p126 = scmp.eq.s32.totalorder %s18, 0
      %p127 = por %p125, %p126
      %p128 = scmp.ne.s32.totalorder %s117, %s120
      %p129 = scmp.eq.s32.totalorder %s23, 1
      %p130 = por %p128, %p129
      %p131 = scmp.ne.s32.totalorder %s120, %s121
      %p132 = scmp.eq.s32.totalorder %s23, 0
      %p133 = por %p131, %p132
      %p134 = scmp.ne.s32.totalorder %s120, %s121
      %p135 = scmp.eq.s32.totalorder %s24, 1
      %p136 = por %p134, %p135
      %p138 = scmp.ne.s32.totalorder %s121, %s137
      %p139 = scmp.eq.s32.totalorder %s24, 0
      %p140 = por %p138, %p139
      %p141 = scmp.le.s32.totalorder 1, %s18
      %p142 = scmp.lt.s32.totalorder %s18, 3
      %p143 = pnand %p141, %p142
      %p144 = pneg %p143
      // Predicated region
      $region9: #{tpu_custom_call.1} parent=5 // pred_check
        _
      $region10: #{tpu_custom_call.1} parent=5 // pred_check_branch
        %146 = sbr.rel (%p143) target = $region12
      $region11: #{tpu_custom_call.1} parent=5 // pred_region
        %s147 = ssub.s32 %s18, 1
        // Predicated region
        $region13: #{tpu_custom_call.1} parent=11 // pred_check
          %p148 = pneg %p65
        $region14: #{tpu_custom_call.1} parent=11 // pred_check_branch
          %150 = sbr.rel (%p148) target = $region16
        $region15: #{tpu_custom_call.1} parent=11 // pred_region
          %s152 = ssub.s32 2432, 2432
          %153 = vsyncadd [#allocation6], %s152
          %s154 = sshll.u32 [#allocation5], 4
          %s155 = int_to_ptr.vmem [resolvable:$true] %s154
          %160 = dma.hbm_to_vmem [thread:$0]  %s1, 2432, %s155, [#allocation6], 128, 128, 8
        $region16: #{tpu_custom_call.1} parent=11 // pred_fallthru
          _
        // Predicated region
        $region17: #{tpu_custom_call.1} parent=11 // pred_check
          %p161 = pneg %p86
        $region18: #{tpu_custom_call.1} parent=11 // pred_check_branch
          %163 = sbr.rel (%p161) target = $region20
        $region19: #{tpu_custom_call.1} parent=11 // pred_region
          %s165 = ssub.s32 16, 16
          %166 = vsyncadd [#allocation6], %s165
          %s168 = sshll.u32 [#allocation7], 4
          %s169 = int_to_ptr.vmem [resolvable:$true] %s168
          %171 = dma.hbm_to_vmem [thread:$0]  %s2, 16, %s169, [#allocation6]
        $region20: #{tpu_custom_call.1} parent=11 // pred_fallthru
          _
        // Predicated region
        $region21: #{tpu_custom_call.1} parent=11 // pred_check
          %p172 = pneg %p107
        $region22: #{tpu_custom_call.1} parent=11 // pred_check_branch
          %174 = sbr.rel (%p172) target = $region24
        $region23: #{tpu_custom_call.1} parent=11 // pred_region
          %s176 = ssub.s32 16, 16
          %177 = vsyncadd [#allocation9], %s176
          %s179 = sshll.u32 [#allocation8], 4
          %s180 = int_to_ptr.vmem [resolvable:$true] %s179
          %182 = dma.hbm_to_vmem [thread:$0]  %s3, 16, %s180, [#allocation9]
        $region24: #{tpu_custom_call.1} parent=11 // pred_fallthru
          _
      $region12: #{tpu_custom_call.1} parent=5 // pred_fallthru
        _
      %p183 = scmp.lt.s32.totalorder %s18, 2
      // Predicated region
      $region25: #{tpu_custom_call.1} parent=5 // pred_check
        %p184 = pneg %p183
      $region26: #{tpu_custom_call.1} parent=5 // pred_check_branch
        %186 = sbr.rel (%p184) target = $region28
      $region27: #{tpu_custom_call.1} parent=5 // pred_region
        // Predicated region
        $region29: #{tpu_custom_call.1} parent=27 // pred_check
          %p187 = pneg %p38
        $region30: #{tpu_custom_call.1} parent=27 // pred_check_branch
          %189 = sbr.rel (%p187) target = $region32
        $region31: #{tpu_custom_call.1} parent=27 // pred_region
          %s190 = sand.u32 %s28, 1
          %s191 = scalar_lea.sflag [#allocation3], %s190
          %s192 = sand.u32 %s28, 1
          %s193 = smul.addr %s192, 32
          %s194 = scalar_lea.vmem [#allocation2], %s193
          %s195 = smul.u32 2, %s18
          %s197 = ssub.s32 512, 512
          %198 = vsyncadd %s191, %s197
          %s199 = smul.addr %s195, 2
          %s200 = smul.addr %s199, 128
          %s201 = scalar_lea.hbm %s0, %s200
          %s202 = sshll.u32 %s194, 4
          %s203 = int_to_ptr.vmem [resolvable:$true] %s202
          %208 = dma.hbm_to_vmem [thread:$0]  %s201, 512, %s203, %s191, 256, 256, 16
        $region32: #{tpu_custom_call.1} parent=27 // pred_fallthru
          _
      $region28: #{tpu_custom_call.1} parent=5 // pred_fallthru
        _
      %p209 = scmp.le.s32.totalorder 1, %s18
      %p210 = scmp.lt.s32.totalorder %s18, 3
      %p211 = pnand %p209, %p210
      %p212 = pneg %p211
      // Predicated region
      $region33: #{tpu_custom_call.1} parent=5 // pred_check
        _
      $region34: #{tpu_custom_call.1} parent=5 // pred_check_branch
        %214 = sbr.rel (%p211) target = $region36
      $region35: #{tpu_custom_call.1} parent=5 // pred_region
        %s215 = ssub.s32 %s18, 1
        %s216 = sand.u32 %s31, 1
        %s217 = scalar_lea.sflag [#allocation3], %s216
        %s218 = sand.u32 %s31, 1
        %s219 = smul.addr %s218, 32
        %s220 = scalar_lea.vmem [#allocation2], %s219
        // Predicated region
        $region37: #{tpu_custom_call.1} parent=35 // pred_check
          %p221 = pneg %p44
        $region38: #{tpu_custom_call.1} parent=35 // pred_check_branch
          %223 = sbr.rel (%p221) target = $region40
        $region39: #{tpu_custom_call.1} parent=35 // pred_region
          %224 = dma.done %s217, 512
        $region40: #{tpu_custom_call.1} parent=35 // pred_fallthru
          _
        // Predicated region
        $region41: #{tpu_custom_call.1} parent=35 // pred_check
          %p225 = pneg %p65
        $region42: #{tpu_custom_call.1} parent=35 // pred_check_branch
          %227 = sbr.rel (%p225) target = $region44
        $region43: #{tpu_custom_call.1} parent=35 // pred_region
          %228 = dma.done [#allocation6], 2432
        $region44: #{tpu_custom_call.1} parent=35 // pred_fallthru
          _
        // Predicated region
        $region45: #{tpu_custom_call.1} parent=35 // pred_check
          %p229 = pneg %p86
        $region46: #{tpu_custom_call.1} parent=35 // pred_check_branch
          %231 = sbr.rel (%p229) target = $region48
        $region47: #{tpu_custom_call.1} parent=35 // pred_region
          %232 = dma.done [#allocation6], 16
        $region48: #{tpu_custom_call.1} parent=35 // pred_fallthru
          _
        // Predicated region
        $region49: #{tpu_custom_call.1} parent=35 // pred_check
          %p233 = pneg %p107
        $region50: #{tpu_custom_call.1} parent=35 // pred_check_branch
          %235 = sbr.rel (%p233) target = $region52
        $region51: #{tpu_custom_call.1} parent=35 // pred_region
          %236 = dma.done [#allocation9], 16
        $region52: #{tpu_custom_call.1} parent=35 // pred_fallthru
          _
        %s237 = sand.u32 %s31, 1
        %s238 = scalar_lea.sflag [#allocation3], %s237
        %s239 = sand.u32 %s31, 1
        %s240 = smul.addr %s239, 32
        %s241 = scalar_lea.vmem [#allocation2], %s240
        %p242 = pneg %p44
        %p243 = pneg %p41
        %p244 = pneg %p65
        %p245 = pneg %p62
        %p246 = pneg %p86
        %p247 = pneg %p83
        %p248 = pneg %p107
        %p249 = pneg %p104
        %p250 = pneg %p133
        %p251 = pneg %p130
        %s252 = sand.u32 %s120, 1
        %s253 = scalar_lea.sflag [#allocation4], %s252
        %s254 = sand.u32 %s120, 1
        %s255 = smul.addr %s254, 16
        %s256 = scalar_lea.vmem [#allocation10], %s255
        %s257 = smul.u32 2, %s23
        %s258 = smul.u32 2, %s23
        %v259 = vld [vmem:[%s220] sm:$0xff]
        %v260 = vld [vmem:[%s220 + $0x8] sm:$0xff]
        %v261 = vld [vmem:[%s220 + $0x10] sm:$0xff]
        %v262 = vld [vmem:[%s220 + $0x18] sm:$0xff]
        %v263 = vld [vmem:[#allocation5] sm:$0xff]
        %v264 = vld [vmem:[#allocation5 + $0x8] sm:$0xff]
        %v265 = vld [vmem:[#allocation5 + $0x10] sm:$0xff]
        %v266 = vld [vmem:[#allocation5 + $0x18] sm:$0xff]
        %v267 = vld [vmem:[#allocation5 + $0x20] sm:$0xff]
        %v268 = vld [vmem:[#allocation5 + $0x28] sm:$0xff]
        %v269 = vld [vmem:[#allocation5 + $0x30] sm:$0xff]
        %v270 = vld [vmem:[#allocation5 + $0x38] sm:$0xff]
        %v271 = vld [vmem:[#allocation5 + $0x40] sm:$0xff]
        %v272 = vld [vmem:[#allocation5 + $0x48] sm:$0xff]
        %v273 = vld [vmem:[#allocation5 + $0x50] sm:$0xff]
        %v274 = vld [vmem:[#allocation5 + $0x58] sm:$0xff]
        %v275 = vld [vmem:[#allocation5 + $0x60] sm:$0xff]
        %v276 = vld [vmem:[#allocation5 + $0x68] sm:$0xff]
        %v277 = vld [vmem:[#allocation5 + $0x70] sm:$0xff]
        %v278 = vld [vmem:[#allocation5 + $0x78] sm:$0xff]
        %v279 = vld [vmem:[#allocation5 + $0x80] sm:$0xff]
        %v280 = vld [vmem:[#allocation5 + $0x88] sm:$0xff]
        %v281 = vld [vmem:[#allocation5 + $0x90] sm:$0x7]
        %v282 = vld [vmem:[#allocation7] sm:$0x1]
        %v284 = vlaneseq
        %v285 = vshrl.u32 %v284, 7
        %v286 = vsub.s32 0, %v285
        %v287 = vrot.slane %v282, %v286
        %vm289 = vcmask 154624
        %v291 = vsel %vm289, %v260, 0
        %v294 = vsel %vm289, %v262, 0
        %vm296 = vcmask 1042432
        %v298 = vsel %vm296, %v281, 0
        %300 = vmatprep.subr.mxu0 0.0
        %301 = vmatpush1.msra.mxu0 %v263
        %302 = vmatprep.subr.mxu0 0.0
        %303 = vmatpush1.msra.mxu0 %v264
        %304 = vmatprep.subr.mxu0 0.0
        %305 = vmatpush1.msra.mxu0 %v265
        %306 = vmatprep.subr.mxu0 0.0
        %307 = vmatpush1.msra.mxu0 %v266
        %308 = vmatprep.subr.mxu0 0.0
        %309 = vmatpush1.msra.mxu0 %v267
        %310 = vmatprep.subr.mxu0 0.0
        %311 = vmatpush1.msra.mxu0 %v268
        %312 = vmatprep.subr.mxu0 0.0
        %313 = vmatpush1.msra.mxu0 %v269
        %314 = vmatprep.subr.mxu0 0.0
        %315 = vmatpush1.msra.mxu0 %v270
        %316 = vmatprep.subr.mxu0 0.0
        %317 = vmatpush1.msra.mxu0 %v271
        %318 = vmatprep.subr.mxu0 0.0
        %319 = vmatpush1.msra.mxu0 %v272
        %320 = vmatprep.subr.mxu0 0.0
        %321 = vmatpush1.msra.mxu0 %v273
        %322 = vmatprep.subr.mxu0 0.0
        %323 = vmatpush1.msra.mxu0 %v274
        %324 = vmatprep.subr.mxu0 0.0
        %325 = vmatpush1.msra.mxu0 %v275
        %326 = vmatprep.subr.mxu0 0.0
        %327 = vmatpush1.msra.mxu0 %v276
        %328 = vmatprep.subr.mxu0 0.0
        %329 = vmatpush1.msra.mxu0 %v277
        %330 = vmatprep.subr.mxu0 0.0
        %331 = vmatpush1.msra.mxu0 %v278
        %332 = vmatprep.subr.mxu0 0.0
        %333 = vmatpush1.msra.mxu0 %v279
        %334 = vmatprep.subr.mxu0 0.0
        %335 = vmatpush1.msra.mxu0 %v280
        %336 = vmatprep.subr.mxu0 0.0
        %337 = vmatpush1.msra.mxu0 %v298
        %338 = vmatprep.subr.mxu0 0.0
        %339 = vmatpush1.msra.mxu0 0.0
        %340 = vmatprep.subr.mxu0 0.0
        %341 = vmatpush1.msra.mxu0 0.0
        %342 = vmatprep.subr.mxu0 0.0
        %343 = vmatpush1.msra.mxu0 0.0
        %344 = vmatprep.subr.mxu0 0.0
        %345 = vmatpush1.msra.mxu0 0.0
        %346 = vmatprep.subr.mxu0 0.0
        %347 = vmatpush1.msra.mxu0 0.0
        %348 = vmatprep.subr.mxu0 0.0
        %349 = vmatpush1.msra.mxu0 0.0
        %350 = vmatprep.subr.mxu0 0.0
        %351 = vmatpush1.msra.mxu0 0.0
        %352 = vmatprep.subr.mxu0 0.0
        %353 = vmatpush1.msra.mxu0 0.0
        %354 = vmatprep.subr.mxu0 0.0
        %355 = vmatpush1.msra.mxu0 0.0
        %356 = vmatprep.subr.mxu0 0.0
        %357 = vmatpush1.msra.mxu0 0.0
        %358 = vmatprep.subr.mxu0 0.0
        %359 = vmatpush1.msra.mxu0 0.0
        %360 = vmatprep.subr.mxu0 0.0
        %361 = vmatpush1.msra.mxu0 0.0
        %362 = vmatprep.subr.mxu0 0.0
        %363 = vmatpush1.msra.mxu0 0.0
        %364 = vmatprep.mubr.f32.mxu0 %v291
        %365 = vmatmul.mubr.f32.gmra.mrb[0].mxu0 %v259
        %v366 = vpop.f32.mrb[0].mxu0
        %v367 = vadd.f32 %v287, %v366
        %v368 = vpop.f32.mrb[0].mxu0
        %369 = vmatprep.mubr.f32.mxu0 %v294
        %370 = vmatmul.mubr.f32.gmra.mrb[0].mxu0 %v261
        %v371 = vpop.f32.mrb[0].mxu0
        %v372 = vadd.f32 %v287, %v371
        %v373 = vpop.f32.mrb[0].mxu0
        %374 = vdwg.mxu0
        %v375 = vmul.f32 %v367, %v367
        %v376 = vmul.f32 %v372, %v372
        %vm377 = vcmask 523264
        %v378 = vsel %vm377, %v375, 0.0
        %379 = vadd.xlane.f32.xlu0 %v378
        %v380 = vpop.xlane.xlu0 %379
        %v381 = vsel %vm377, %v376, 0.0
        %382 = vadd.xlane.f32.xlu0 %v381
        %v383 = vpop.xlane.xlu0 %382
        %v384 = vrcp.pop 64.0
        %v385 = vmul.f32 %v380, %v384
        %v386 = vmul.f32 %v383, %v384
        %v387 = vadd.f32 %v385, 1.1920929e-07
        %v388 = vadd.f32 %v386, 1.1920929e-07
        %v389 = vrsqrt.pop %v387
        %v390 = vrsqrt.pop %v388
        %v391 = vmul.f32 %v367, %v389
        %v392 = vmul.f32 %v372, %v390
        %v393 = vld [vmem:[#allocation8] sm:$0x1]
        %v395 = vlaneseq
        %v396 = vshrl.u32 %v395, 7
        %v397 = vsub.s32 0, %v396
        %v398 = vrot.slane %v393, %v397
        %v400 = vmul.f32 %v391, %v398
        %v401 = vmul.f32 %v392, %v398
        %402 = vst.msk [vmem:[%s256] sm:$0xff] %vm377, %v400
        %403 = vst.msk [vmem:[%s256 + $0x8] sm:$0xff] %vm377, %v401
        %s404 = sand.u32 %s120, 1
        %s405 = scalar_lea.sflag [#allocation4], %s404
        %s406 = sand.u32 %s120, 1
        %s407 = smul.addr %s406, 16
        %s408 = scalar_lea.vmem [#allocation10], %s407
        // Predicated region
        $region53: #{tpu_custom_call.1} parent=35 // pred_check
          %p409 = pneg %p130
        $region54: #{tpu_custom_call.1} parent=35 // pred_check_branch
          %411 = sbr.rel (%p409) target = $region56
        $region55: #{tpu_custom_call.1} parent=35 // pred_region
          %s412 = smul.u32 2, %s23
          %s414 = ssub.s32 256, 256
          %415 = vsyncadd %s405, %s414
          %s416 = smul.addr %s412, 128
          %s417 = scalar_lea.hbm %s4, %s416
          %s418 = sshll.u32 %s408, 4
          %s419 = int_to_ptr.vmem [resolvable:$true] %s418
          %424 = dma.vmem_to_hbm [thread:$0]  %s419, 256, %s417, %s405, 128, 128, 8
        $region56: #{tpu_custom_call.1} parent=35 // pred_fallthru
          _
      $region36: #{tpu_custom_call.1} parent=5 // pred_fallthru
        _
      %p425 = scmp.le.s32.totalorder 2, %s18
      // Predicated region
      $region57: #{tpu_custom_call.1} parent=5 // pred_check
        %p426 = pneg %p425
      $region58: #{tpu_custom_call.1} parent=5 // pred_check_branch
        %428 = sbr.rel (%p426) target = $region60
      $region59: #{tpu_custom_call.1} parent=5 // pred_region
        %s429 = ssub.s32 %s18, 2
        // Predicated region
        $region61: #{tpu_custom_call.1} parent=59 // pred_check
          %p430 = pneg %p136
        $region62: #{tpu_custom_call.1} parent=59 // pred_check_branch
          %432 = sbr.rel (%p430) target = $region64
        $region63: #{tpu_custom_call.1} parent=59 // pred_region
          %s433 = sand.u32 %s121, 1
          %s434 = scalar_lea.sflag [#allocation4], %s433
          %s435 = sand.u32 %s121, 1
          %s436 = smul.addr %s435, 16
          %s437 = scalar_lea.vmem [#allocation10], %s436
          %438 = dma.done %s434, 256
        $region64: #{tpu_custom_call.1} parent=59 // pred_fallthru
          _
      $region60: #{tpu_custom_call.1} parent=5 // pred_fallthru
        _
    $region6: #{tpu_custom_call.1} parent=1 // loop_footer
      %s22 = sadd.s32 1, %s18
    $region7: #{tpu_custom_call.1} parent=1 // loop_footer_branch
      %17 = sbr.rel target = $region3
    $region8: #{tpu_custom_call.1} parent=1 // loop_exit
      _
    %439 = vsyncpa [#allocation3], 1
    %s440 = scalar_lea.sflag [#allocation3], 1
    %441 = vsyncpa %s440, 1
    %442 = vsyncpa [#allocation6], 1
    %443 = vsyncpa [#allocation9], 1
    %444 = vsyncpa [#allocation4], 1
    %s445 = scalar_lea.sflag [#allocation4], 1
    %446 = vsyncpa %s445, 1

</llo_original>
